<compile_context>
chip_gen: v5e
topology: v5e:2x2
jax: 0.10.0
libtpu: 0.0.40
codegen_flags: <defaults>
</compile_context>

<pallas_src>
import jax
import jax.numpy as jnp
from jax import lax
from jax.experimental import pallas as pl
from jax.experimental.pallas import tpu as pltpu

BN_EPS = 1e-5
NEG_SLOPE = 0.01            # PyTorch F.leaky_relu default
SUBLANE_F32 = 8             # f32 sublane granularity
TILE_B_MAX = 1024           # upper bound on batch rows per grid step
VMEM_BUDGET_BYTES = 24 << 20  # per-step VMEM budget used to derive tile_b
VMEM_LIMIT_CAP = 48 << 20     # never request more scoped VMEM than this


def _leaky_relu(x):
    return jnp.where(x > 0, x, NEG_SLOPE * x)


def _cdiv(a, b):
    return -(-a // b)


def _round_up(n, m):
    return _cdiv(n, m) * m


# ---------------------------------------------------------------------------
# Kernel: fc1 -> leaky_relu -> fc3 -> leaky_relu -> fc4 (BN folded, eval mode)
# ---------------------------------------------------------------------------
def simple_mlp_kernel(x_ref, w1_ref, b1_ref, w3_ref, b3_ref, w4_ref, b4_ref,
                      out_ref):
    cdt = w1_ref.dtype  # MXU operand dtype (bf16); accumulate in f32

    x = x_ref[...].astype(cdt)
    h = jnp.dot(x, w1_ref[...], preferred_element_type=jnp.float32) + b1_ref[...]
    h = _leaky_relu(h)                                      # f32 on the VPU

    h = (jnp.dot(h.astype(cdt), w3_ref[...],
                 preferred_element_type=jnp.float32) + b3_ref[...])
    h = _leaky_relu(h)

    # Narrow (num_clients-wide) output; block spans the full last dim, so the
    # HBM writeback stays contiguous and carries no zero padding.
    out_ref[...] = (jnp.dot(h.astype(cdt), w4_ref[...],
                            preferred_element_type=jnp.float32) + b4_ref[...])


# ---------------------------------------------------------------------------
# Host-side parameter preparation: BN folding + weight casting (no padding).
# ---------------------------------------------------------------------------
def fold_params(params, weight_dtype=jnp.bfloat16):
    s1 = params["bn1_g"] * lax.rsqrt(params["bn1_v"] + BN_EPS)      # (1, H)
    w1 = params["w1"] * s1                                          # column scale
    b1 = (params["b1"] - params["bn1_m"]) * s1 + params["bn1_b"]

    s3 = params["bn3_g"] * lax.rsqrt(params["bn3_v"] + BN_EPS)
    w3 = params["w3"] * s3
    b3 = (params["b3"] - params["bn3_m"]) * s3 + params["bn3_b"]

    return {
        "w1": w1.astype(weight_dtype), "b1": b1.astype(jnp.float32),
        "w3": w3.astype(weight_dtype), "b3": b3.astype(jnp.float32),
        "w4": params["w4"].astype(weight_dtype),
        "b4": params["b4"].astype(jnp.float32),
    }


def _choose_tiling(batch, emb, hidden, out_dim, weight_bytes):
    """Pick (tile_b, batch_pad, per-step VMEM estimate)."""
    def step_vmem(tb):
        io = 2 * tb * (emb + out_dim) * 4      # x / out tiles, double-buffered
        act = 2 * tb * hidden * 4              # two live f32 hidden activations
        return io + act + 2 * weight_bytes     # resident weights (double-buffered)

    n_tiles = max(1, _cdiv(batch, TILE_B_MAX))
    # v7x has 2 TensorCores; give the "parallel" batch axis >= 2 grid steps
    # whenever the extra padding this causes is at most a few rows.
    if n_tiles == 1 and batch >= 2 * SUBLANE_F32:
        n_tiles = 2
    tile_b = _round_up(_cdiv(batch, n_tiles), SUBLANE_F32)
    # Shrink the tile (by adding grid steps) if it would blow the VMEM budget.
    while step_vmem(tile_b) > VMEM_BUDGET_BYTES and tile_b > SUBLANE_F32:
        n_tiles += 1
        tile_b = _round_up(_cdiv(batch, n_tiles), SUBLANE_F32)
    return tile_b, n_tiles * tile_b, step_vmem(tile_b)


@jax.jit
def simple_mlp_forward(x, folded):
    """Runs the fused MLP. x: (B, E); returns logits (B, num_clients) f32."""
    x = x.astype(jnp.float32)                  # matches `input.float()`
    batch, emb = x.shape
    hidden = folded["w1"].shape[1]
    num_clients = folded["w4"].shape[1]

    weight_bytes = int(sum(folded[k].size * folded[k].dtype.itemsize
                           for k in ("w1", "b1", "w3", "b3", "w4", "b4")))
    tile_b, batch_pad, vmem_need = _choose_tiling(
        batch, emb, hidden, num_clients, weight_bytes)
    if batch_pad != batch:
        x = jnp.pad(x, ((0, batch_pad - batch), (0, 0)))
    n_tiles = batch_pad // tile_b

    def const(i):                              # weights resident across steps
        return (0, 0)

    flops = 2 * batch_pad * (emb * hidden + hidden * hidden
                             + hidden * num_clients)
    bytes_accessed = int(batch_pad * emb * 4 + weight_bytes
                         + batch_pad * num_clients * 4)
    vmem_limit = int(min(VMEM_LIMIT_CAP, max(2 * vmem_need, 16 << 20)))

    out = pl.pallas_call(
        simple_mlp_kernel,
        out_shape=jax.ShapeDtypeStruct((batch_pad, num_clients), jnp.float32),
        grid=(n_tiles,),
        in_specs=[
            pl.BlockSpec((tile_b, emb), lambda i: (i, 0)),
            pl.BlockSpec(folded["w1"].shape, const),
            pl.BlockSpec(folded["b1"].shape, const),
            pl.BlockSpec(folded["w3"].shape, const),
            pl.BlockSpec(folded["b3"].shape, const),
            pl.BlockSpec(folded["w4"].shape, const),
            pl.BlockSpec(folded["b4"].shape, const),
        ],
        out_specs=pl.BlockSpec((tile_b, num_clients), lambda i: (i, 0)),
        compiler_params=pltpu.CompilerParams(
            dimension_semantics=("parallel",),
            vmem_limit_bytes=vmem_limit),
        cost_estimate=pl.CostEstimate(
            flops=flops, transcendentals=0, bytes_accessed=bytes_accessed),
    )(x, folded["w1"], folded["b1"], folded["w3"], folded["b3"],
      folded["w4"], folded["b4"])

    return out[:batch]


# ---------------------------------------------------------------------------
# Parameter init (shapes match the PyTorch module) + references.
# ---------------------------------------------------------------------------
def init_params(key, embedding_dims, hidden_dim, num_clients):
    ks = jax.random.split(key, 8)

    def linear(kw, kb, fan_in, fan_out):
        bound = 1.0 / jnp.sqrt(fan_in)
        w = jax.random.uniform(kw, (fan_in, fan_out), jnp.float32, -bound, bound)
        b = jax.random.uniform(kb, (1, fan_out), jnp.float32, -bound, bound)
        return w, b

    w1, b1 = linear(ks[0], ks[1], embedding_dims, hidden_dim)
    w3, b3 = linear(ks[2], ks[3], hidden_dim, hidden_dim)
    w4, b4 = linear(ks[4], ks[5], hidden_dim, num_clients)

    bn1_g = jnp.ones((1, hidden_dim), jnp.float32)
    bn1_b = jnp.zeros((1, hidden_dim), jnp.float32)
    bn1_m = 0.1 * jax.random.normal(ks[6], (1, hidden_dim), jnp.float32)
    bn1_v = jnp.ones((1, hidden_dim), jnp.float32) + 0.05

    bn3_g = jnp.ones((1, hidden_dim), jnp.float32)
    bn3_b = jnp.zeros((1, hidden_dim), jnp.float32)
    bn3_m = 0.1 * jax.random.normal(ks[7], (1, hidden_dim), jnp.float32)
    bn3_v = jnp.ones((1, hidden_dim), jnp.float32) + 0.05

    return {
        "w1": w1, "b1": b1,
        "bn1_g": bn1_g, "bn1_b": bn1_b, "bn1_m": bn1_m, "bn1_v": bn1_v,
        "w3": w3, "b3": b3,
        "bn3_g": bn3_g, "bn3_b": bn3_b, "bn3_m": bn3_m, "bn3_v": bn3_v,
        "w4": w4, "b4": b4,
    }


def reference_forward_f32(x, p):
    """Pure-f32 reference matching the PyTorch module in eval mode."""
    x = x.astype(jnp.float32)
    h = x @ p["w1"] + p["b1"]
    h = (h - p["bn1_m"]) * lax.rsqrt(p["bn1_v"] + BN_EPS) * p["bn1_g"] + p["bn1_b"]
    h = jnp.where(h > 0, h, NEG_SLOPE * h)
    h = h @ p["w3"] + p["b3"]
    h = (h - p["bn3_m"]) * lax.rsqrt(p["bn3_v"] + BN_EPS) * p["bn3_g"] + p["bn3_b"]
    h = jnp.where(h > 0, h, NEG_SLOPE * h)
    return h @ p["w4"] + p["b4"]


def reference_forward_folded(x, folded):
    """Pure-JAX model of the kernel's exact folded / mixed-precision math."""
    cdt = folded["w1"].dtype
    h = jnp.dot(x.astype(jnp.float32).astype(cdt), folded["w1"],
                preferred_element_type=jnp.float32) + folded["b1"]
    h = jnp.where(h > 0, h, NEG_SLOPE * h)
    h = jnp.dot(h.astype(cdt), folded["w3"],
                preferred_element_type=jnp.float32) + folded["b3"]
    h = jnp.where(h > 0, h, NEG_SLOPE * h)
    return jnp.dot(h.astype(cdt), folded["w4"],
                   preferred_element_type=jnp.float32) + folded["b4"]


if __name__ == "__main__":
    # Small shapes consistent with the module's forward:
    #   input: (batch, embedding_dims); output: (batch, num_clients)
    batch, embedding_dims, hidden_dim, num_clients = 8, 32, 128, 8

    key = jax.random.PRNGKey(0)
    k_x, k_p, k_x2 = jax.random.split(key, 3)
    x = jax.random.normal(k_x, (batch, embedding_dims), jnp.float32)
    params = init_params(k_p, embedding_dims, hidden_dim, num_clients)
    folded = fold_params(params, weight_dtype=jnp.bfloat16)

    logits = simple_mlp_forward(x, folded)
    jax.block_until_ready(logits)
    assert logits.shape == (batch, num_clients)

    # Tight check: kernel vs. pure-JAX model of the same folded / bf16 math.
    ref_folded = reference_forward_folded(x, folded)
    assert jnp.allclose(logits, ref_folded, atol=1e-4, rtol=1e-4), \
        "mismatch vs folded reference"

    # Semantic check: vs. full-f32 eval-mode forward (bf16-weight tolerance).
    ref_f32 = reference_forward_f32(x, params)
    assert jnp.allclose(logits, ref_f32, atol=5e-2, rtol=5e-2), \
        "mismatch vs f32 reference"

    # Multi-tile / padded-batch path (also exercises the >=2-grid-step case
    # that feeds both v7x TensorCores).
    batch2 = 200
    x2 = jax.random.normal(k_x2, (batch2, embedding_dims), jnp.float32)
    logits2 = simple_mlp_forward(x2, folded)
    jax.block_until_ready(logits2)
    assert logits2.shape == (batch2, num_clients)
    assert jnp.allclose(logits2, reference_forward_folded(x2, folded),
                        atol=1e-4, rtol=1e-4), "mismatch on multi-tile batch"

    print("KERNEL_OK")
</pallas_src>

<mosaic_0001>
module attributes {stable_mosaic.version = 11 : i64} {
  func.func @simple_mlp_kernel(%arg0: i32, %arg1: memref<8x32xf32, #tpu.memory_space<vmem>>, %arg2: memref<32x128xbf16, #tpu.memory_space<vmem>>, %arg3: memref<1x128xf32, #tpu.memory_space<vmem>>, %arg4: memref<128x128xbf16, #tpu.memory_space<vmem>>, %arg5: memref<1x128xf32, #tpu.memory_space<vmem>>, %arg6: memref<128x8xbf16, #tpu.memory_space<vmem>>, %arg7: memref<1x8xf32, #tpu.memory_space<vmem>>, %arg8: memref<8x8xf32, #tpu.memory_space<vmem>>) attributes {dimension_semantics = [#tpu.dimension_semantics<parallel>], iteration_bounds = array<i64: 1>, scalar_prefetch = 0 : i64, scratch_operands = 0 : i64, tpu.core_type = #tpu.core_type<tc>, window_params = [{transform_indices = @transform_0, window_bounds = array<i64: 8, 32>}, {pipeline_mode = #tpu.pipeline_mode<synchronous>, transform_indices = @transform_1, window_bounds = array<i64: 32, 128>}, {pipeline_mode = #tpu.pipeline_mode<synchronous>, transform_indices = @transform_2, window_bounds = array<i64: 1, 128>}, {pipeline_mode = #tpu.pipeline_mode<synchronous>, transform_indices = @transform_3, window_bounds = array<i64: 128, 128>}, {pipeline_mode = #tpu.pipeline_mode<synchronous>, transform_indices = @transform_4, window_bounds = array<i64: 1, 128>}, {pipeline_mode = #tpu.pipeline_mode<synchronous>, transform_indices = @transform_5, window_bounds = array<i64: 128, 8>}, {pipeline_mode = #tpu.pipeline_mode<synchronous>, transform_indices = @transform_6, window_bounds = array<i64: 1, 8>}, {transform_indices = @transform_7, window_bounds = array<i64: 8, 8>}]} {
    %c0 = arith.constant 0 : index
    %c0_0 = arith.constant 0 : index
    %0 = vector.load %arg1[%c0, %c0_0] : memref<8x32xf32, #tpu.memory_space<vmem>>, vector<8x32xf32>
    %1 = arith.truncf %0 : vector<8x32xf32> to vector<8x32xbf16>
    %c0_1 = arith.constant 0 : index
    %c0_2 = arith.constant 0 : index
    %2 = vector.load %arg2[%c0_1, %c0_2] : memref<32x128xbf16, #tpu.memory_space<vmem>>, vector<32x128xbf16>
    %cst = arith.constant dense<0.000000e+00> : vector<8x128xf32>
    %3 = tpu.matmul %1, %2, %cst {dimension_numbers = #tpu.dot_dimension_numbers<[1], [0], [0], [1], [0, 0, 1, 1], [], []>} : vector<8x32xbf16>, vector<32x128xbf16>, vector<8x128xf32> -> vector<8x128xf32>
    %c0_3 = arith.constant 0 : index
    %c0_4 = arith.constant 0 : index
    %4 = vector.load %arg3[%c0_3, %c0_4] : memref<1x128xf32, #tpu.memory_space<vmem>>, vector<1x128xf32>
    %5 = vector.broadcast %4 : vector<1x128xf32> to vector<8x128xf32>
    %6 = arith.addf %3, %5 : vector<8x128xf32>
    %cst_5 = arith.constant 0.000000e+00 : f32
    %7 = vector.broadcast %cst_5 : f32 to vector<8x128xf32>
    %8 = arith.cmpf ogt, %6, %7 : vector<8x128xf32>
    %cst_6 = arith.constant 0.00999999977 : f32
    %9 = vector.broadcast %cst_6 : f32 to vector<8x128xf32>
    %10 = arith.mulf %9, %6 : vector<8x128xf32>
    %11 = arith.select %8, %6, %10 : vector<8x128xi1>, vector<8x128xf32>
    %12 = arith.truncf %11 : vector<8x128xf32> to vector<8x128xbf16>
    %c0_7 = arith.constant 0 : index
    %c0_8 = arith.constant 0 : index
    %13 = vector.load %arg4[%c0_7, %c0_8] : memref<128x128xbf16, #tpu.memory_space<vmem>>, vector<128x128xbf16>
    %cst_9 = arith.constant dense<0.000000e+00> : vector<8x128xf32>
    %14 = tpu.matmul %12, %13, %cst_9 {dimension_numbers = #tpu.dot_dimension_numbers<[1], [0], [0], [1], [0, 0, 1, 1], [], []>} : vector<8x128xbf16>, vector<128x128xbf16>, vector<8x128xf32> -> vector<8x128xf32>
    %c0_10 = arith.constant 0 : index
    %c0_11 = arith.constant 0 : index
    %15 = vector.load %arg5[%c0_10, %c0_11] : memref<1x128xf32, #tpu.memory_space<vmem>>, vector<1x128xf32>
    %16 = vector.broadcast %15 : vector<1x128xf32> to vector<8x128xf32>
    %17 = arith.addf %14, %16 : vector<8x128xf32>
    %cst_12 = arith.constant 0.000000e+00 : f32
    %18 = vector.broadcast %cst_12 : f32 to vector<8x128xf32>
    %19 = arith.cmpf ogt, %17, %18 : vector<8x128xf32>
    %cst_13 = arith.constant 0.00999999977 : f32
    %20 = vector.broadcast %cst_13 : f32 to vector<8x128xf32>
    %21 = arith.mulf %20, %17 : vector<8x128xf32>
    %22 = arith.select %19, %17, %21 : vector<8x128xi1>, vector<8x128xf32>
    %23 = arith.truncf %22 : vector<8x128xf32> to vector<8x128xbf16>
    %c0_14 = arith.constant 0 : index
    %c0_15 = arith.constant 0 : index
    %24 = vector.load %arg6[%c0_14, %c0_15] : memref<128x8xbf16, #tpu.memory_space<vmem>>, vector<128x8xbf16>
    %cst_16 = arith.constant dense<0.000000e+00> : vector<8x8xf32>
    %25 = tpu.matmul %23, %24, %cst_16 {dimension_numbers = #tpu.dot_dimension_numbers<[1], [0], [0], [1], [0, 0, 1, 1], [], []>} : vector<8x128xbf16>, vector<128x8xbf16>, vector<8x8xf32> -> vector<8x8xf32>
    %c0_17 = arith.constant 0 : index
    %c0_18 = arith.constant 0 : index
    %26 = vector.load %arg7[%c0_17, %c0_18] : memref<1x8xf32, #tpu.memory_space<vmem>>, vector<1x8xf32>
    %27 = vector.broadcast %26 : vector<1x8xf32> to vector<8x8xf32>
    %28 = arith.addf %25, %27 : vector<8x8xf32>
    %c0_19 = arith.constant 0 : index
    %c0_20 = arith.constant 0 : index
    %29 = vector.load %arg8[%c0_19, %c0_20] : memref<8x8xf32, #tpu.memory_space<vmem>>, vector<8x8xf32>
    tpu.vector_store %arg8[%c0_19, %c0_20], %28 {strides = array<i32>} : memref<8x8xf32, #tpu.memory_space<vmem>>, vector<8x8xf32>,
    return
  }
  func.func @transform_0(%arg0: i32) -> (i32, i32) {
    %c0_i32 = arith.constant 0 : i32
    %c0_i32_0 = arith.constant 0 : i32
    return %arg0, %c0_i32 : i32, i32
  }
  func.func @transform_1(%arg0: i32) -> (i32, i32) {
    %c0_i32 = arith.constant 0 : i32
    %c0_i32_0 = arith.constant 0 : i32
    %c0_i32_1 = arith.constant 0 : i32
    return %c0_i32, %c0_i32_0 : i32, i32
  }
  func.func @transform_2(%arg0: i32) -> (i32, i32) {
    %c0_i32 = arith.constant 0 : i32
    %c0_i32_0 = arith.constant 0 : i32
    %c0_i32_1 = arith.constant 0 : i32
    return %c0_i32, %c0_i32_0 : i32, i32
  }
  func.func @transform_3(%arg0: i32) -> (i32, i32) {
    %c0_i32 = arith.constant 0 : i32
    %c0_i32_0 = arith.constant 0 : i32
    %c0_i32_1 = arith.constant 0 : i32
    return %c0_i32, %c0_i32_0 : i32, i32
  }
  func.func @transform_4(%arg0: i32) -> (i32, i32) {
    %c0_i32 = arith.constant 0 : i32
    %c0_i32_0 = arith.constant 0 : i32
    %c0_i32_1 = arith.constant 0 : i32
    return %c0_i32, %c0_i32_0 : i32, i32
  }
  func.func @transform_5(%arg0: i32) -> (i32, i32) {
    %c0_i32 = arith.constant 0 : i32
    %c0_i32_0 = arith.constant 0 : i32
    %c0_i32_1 = arith.constant 0 : i32
    return %c0_i32, %c0_i32_0 : i32, i32
  }
  func.func @transform_6(%arg0: i32) -> (i32, i32) {
    %c0_i32 = arith.constant 0 : i32
    %c0_i32_0 = arith.constant 0 : i32
    %c0_i32_1 = arith.constant 0 : i32
    return %c0_i32, %c0_i32_0 : i32, i32
  }
  func.func @transform_7(%arg0: i32) -> (i32, i32) {
    %c0_i32 = arith.constant 0 : i32
    %c0_i32_0 = arith.constant 0 : i32
    return %arg0, %c0_i32 : i32, i32
  }
}

</mosaic_0001>

<llo_original>
// kernel: simple_mlp_forward.1
$region0: #{simple_mlp_forward.1}
  #allocation0 [shape = 'u32[]', space=smem, size = 0x4, offset = 0x4, fixed_abs, tag = 'smem constant byte address 0x4 - core index']
  #allocation1 [shape = 'u32[72,128]{1,0:T(1,128)}', space=vmem, size = 0x9000, scoped, tag = 'internal scratch']
  %s0 = inlined_call_operand.vmem [shape: f32[8,32], index: 0, kind: input, shape index: {}]
  %s1 = inlined_call_operand.hbm [shape: bf16[32,128], index: 1, kind: input, shape index: {}]
  %s2 = inlined_call_operand.hbm [shape: f32[1,128], index: 2, kind: input, shape index: {}]
  %s3 = inlined_call_operand.vmem [shape: bf16[128,128], index: 3, kind: input, shape index: {}]
  %s4 = inlined_call_operand.hbm [shape: f32[1,128], index: 4, kind: input, shape index: {}]
  %s5 = inlined_call_operand.vmem [shape: bf16[128,8], index: 5, kind: input, shape index: {}]
  %s6 = inlined_call_operand.hbm [shape: f32[1,8], index: 6, kind: input, shape index: {}]
  %s7 = inlined_call_operand.hbm [shape: f32[8,8], index: 7, kind: output, shape index: {}]
  %s8 = sld [smem:[#allocation0]]
  $region54: #{simple_mlp_forward.1} parent=0
    _
  %s10 = ssub.s32 1, %s8
  %s11 = scalar_select 0, %s10, %s8
  $region1: #{simple_mlp_forward.1} parent=0
    #allocation2 [shape = 'u8[8192]{0}', space=vmem, size = 0x2000, scoped, tag = 'input window, operand 1, single buffered']
    #allocation3 [shape = 's32[1]{0}', space=sflag, size = 0x4, scoped, tag = 'scoped memory for simple_mlp_forward.1']
    #allocation4 [shape = 's32[1]{0}', space=sflag, size = 0x4, scoped, tag = 'scoped memory for simple_mlp_forward.1']
    #allocation5 [shape = 'u8[512]{0}', space=vmem, size = 0x400, scoped, tag = 'input window, operand 2, single buffered']
    #allocation6 [shape = 's32[1]{0}', space=sflag, size = 0x4, scoped, tag = 'scoped memory for simple_mlp_forward.1']
    #allocation7 [shape = 'u8[512]{0}', space=vmem, size = 0x400, scoped, tag = 'input window, operand 4, single buffered']
    #allocation8 [shape = 'u8[512]{0}', space=vmem, size = 0x400, scoped, tag = 'input window, operand 6, single buffered']
    #allocation9 [shape = 's32[1]{0}', space=sflag, size = 0x4, scoped, tag = 'scoped memory for simple_mlp_forward.1']
    #allocation10 [shape = 'u8[4096]{0}', space=vmem, size = 0x1000, scoped, tag = 'output window, operand 0, single buffered']
    %12 = vsyncpa [#allocation3], 0
    %13 = vsyncpa [#allocation6], 0
    %14 = vsyncpa [#allocation9], 0
    %15 = vsyncpa [#allocation4], 0
    // Predicated region
    $region2: #{simple_mlp_forward.1} parent=1 // pred_check
      _
    $region3: #{simple_mlp_forward.1} parent=1 // pred_check_branch
      %17 = sbr.rel (0) target = $region5
    $region4: #{simple_mlp_forward.1} parent=1 // pred_region
      _
    $region5: #{simple_mlp_forward.1} parent=1 // pred_fallthru
      _
    // Predicated region
    $region6: #{simple_mlp_forward.1} parent=1 // pred_check
      _
    $region7: #{simple_mlp_forward.1} parent=1 // pred_check_branch
      %19 = sbr.rel (0) target = $region9
    $region8: #{simple_mlp_forward.1} parent=1 // pred_region
      %21 = vsyncadd [#allocation3], 0
      %s22 = sshll.u32 %s1, 4
      %s23 = int_to_ptr.hbm [resolvable:$true] %s22
      %s24 = sshll.u32 [#allocation2], 4
      %s25 = int_to_ptr.vmem [resolvable:$true] %s24
      %30 = dma.hbm_to_vmem [thread:$0]  %s23, 256, %s25, [#allocation3], 64, 64, 4
    $region9: #{simple_mlp_forward.1} parent=1 // pred_fallthru
      _
    // Predicated region
    $region10: #{simple_mlp_forward.1} parent=1 // pred_check
      _
    $region11: #{simple_mlp_forward.1} parent=1 // pred_check_branch
      %32 = sbr.rel (0) target = $region13
    $region12: #{simple_mlp_forward.1} parent=1 // pred_region
      %34 = vsyncadd [#allocation6], 0
      %s36 = sshll.u32 %s2, 4
      %s37 = int_to_ptr.hbm [resolvable:$true] %s36
      %s38 = sshll.u32 [#allocation5], 4
      %s39 = int_to_ptr.vmem [resolvable:$true] %s38
      %41 = dma.hbm_to_vmem [thread:$0]  %s37, 16, %s39, [#allocation6]
    $region13: #{simple_mlp_forward.1} parent=1 // pred_fallthru
      _
    // Predicated region
    $region14: #{simple_mlp_forward.1} parent=1 // pred_check
      _
    $region15: #{simple_mlp_forward.1} parent=1 // pred_check_branch
      %43 = sbr.rel (0) target = $region17
    $region16: #{simple_mlp_forward.1} parent=1 // pred_region
      _
    $region17: #{simple_mlp_forward.1} parent=1 // pred_fallthru
      _
    // Predicated region
    $region18: #{simple_mlp_forward.1} parent=1 // pred_check
      _
    $region19: #{simple_mlp_forward.1} parent=1 // pred_check_branch
      %45 = sbr.rel (0) target = $region21
    $region20: #{simple_mlp_forward.1} parent=1 // pred_region
      %47 = vsyncadd [#allocation6], 0
      %s49 = sshll.u32 %s4, 4
      %s50 = int_to_ptr.hbm [resolvable:$true] %s49
      %s51 = sshll.u32 [#allocation7], 4
      %s52 = int_to_ptr.vmem [resolvable:$true] %s51
      %54 = dma.hbm_to_vmem [thread:$0]  %s50, 16, %s52, [#allocation6]
    $region21: #{simple_mlp_forward.1} parent=1 // pred_fallthru
      _
    // Predicated region
    $region22: #{simple_mlp_forward.1} parent=1 // pred_check
      _
    $region23: #{simple_mlp_forward.1} parent=1 // pred_check_branch
      %56 = sbr.rel (0) target = $region25
    $region24: #{simple_mlp_forward.1} parent=1 // pred_region
      _
    $region25: #{simple_mlp_forward.1} parent=1 // pred_fallthru
      _
    // Predicated region
    $region26: #{simple_mlp_forward.1} parent=1 // pred_check
      _
    $region27: #{simple_mlp_forward.1} parent=1 // pred_check_branch
      %58 = sbr.rel (0) target = $region29
    $region28: #{simple_mlp_forward.1} parent=1 // pred_region
      %60 = vsyncadd [#allocation9], 0
      %s62 = sshll.u32 %s6, 4
      %s63 = int_to_ptr.hbm [resolvable:$true] %s62
      %s64 = sshll.u32 [#allocation8], 4
      %s65 = int_to_ptr.vmem [resolvable:$true] %s64
      %67 = dma.hbm_to_vmem [thread:$0]  %s63, 16, %s65, [#allocation9]
    $region29: #{simple_mlp_forward.1} parent=1 // pred_fallthru
      _
    // Predicated region
    $region30: #{simple_mlp_forward.1} parent=1 // pred_check
      _
    $region31: #{simple_mlp_forward.1} parent=1 // pred_check_branch
      %69 = sbr.rel (0) target = $region33
    $region32: #{simple_mlp_forward.1} parent=1 // pred_region
      %71 = dma.done [#allocation3], 256
    $region33: #{simple_mlp_forward.1} parent=1 // pred_fallthru
      _
    // Predicated region
    $region34: #{simple_mlp_forward.1} parent=1 // pred_check
      _
    $region35: #{simple_mlp_forward.1} parent=1 // pred_check_branch
      %73 = sbr.rel (0) target = $region37
    $region36: #{simple_mlp_forward.1} parent=1 // pred_region
      %75 = dma.done [#allocation6], 16
    $region37: #{simple_mlp_forward.1} parent=1 // pred_fallthru
      _
    // Predicated region
    $region38: #{simple_mlp_forward.1} parent=1 // pred_check
      _
    $region39: #{simple_mlp_forward.1} parent=1 // pred_check_branch
      %77 = sbr.rel (0) target = $region41
    $region40: #{simple_mlp_forward.1} parent=1 // pred_region
      %79 = dma.done [#allocation6], 16
    $region41: #{simple_mlp_forward.1} parent=1 // pred_fallthru
      _
    // Predicated region
    $region42: #{simple_mlp_forward.1} parent=1 // pred_check
      _
    $region43: #{simple_mlp_forward.1} parent=1 // pred_check_branch
      %81 = sbr.rel (0) target = $region45
    $region44: #{simple_mlp_forward.1} parent=1 // pred_region
      %83 = dma.done [#allocation9], 16
    $region45: #{simple_mlp_forward.1} parent=1 // pred_fallthru
      _
    %v85 = vld [vmem:[%s0] sm:$0xff]
    %v86 = vpack.c.bf16 %v85, %v85
    %v87 = vld [vmem:[#allocation2] sm:$0xf]
    %v88 = vld [vmem:[#allocation2 + $0x4] sm:$0xf]
    %v89 = vld [vmem:[#allocation2 + $0x8] sm:$0xf]
    %v90 = vld [vmem:[#allocation2 + $0xc] sm:$0xf]
    %v91 = vld [vmem:[#allocation5] sm:$0x1]
    %v93 = vperm.slane %v91, 0
    %v99 = vunpack.c.l.b16 %v87
    %v100 = vunpack.c.l.b16 %v88
    %v101 = vunpack.c.l.b16 %v89
    %v102 = vunpack.c.l.b16 %v90
    %v103 = vpack.c.b16 %v100, %v99
    %v104 = vpack.c.b16 %v102, %v101
    %vm107 = vcmask 261120
    %v109 = vsel %vm107, %v86, 0
    %111 = vmatpush.bf16.msra.mxu0 0
    %112 = vmatpush.bf16.msra.mxu0 0
    %113 = vmatpush.bf16.msra.mxu0 0
    %114 = vmatpush.bf16.msra.mxu0 0
    %115 = vmatpush.bf16.msra.mxu0 0
    %116 = vmatpush.bf16.msra.mxu0 0
    %117 = vmatpush.bf16.msra.mxu0 %v104
    %118 = vmatpush.bf16.msra.mxu0 %v103
    %119 = vmatmul.bf16.gmra.mxu0 %v109
    %v120 = vpop.f32.mrf.mxu0
    %v121 = vadd.f32 %v93, %v120
    %v122 = vpop.f32.mrf.mxu0
    %123 = vdwg.mxu0
    %vm124 = vcmp.gt.f32.partialorder %v121, 0.0
    %v125 = vmul.f32 %v121, 0.01
    %v126 = vsel %vm124, %v121, %v125
    %v127 = vpack.c.bf16 %v126, %v126
    %v128 = vld [vmem:[%s3] sm:$0xf]
    %v129 = vld [vmem:[%s3 + $0x4] sm:$0xf]
    %v130 = vld [vmem:[%s3 + $0x8] sm:$0xf]
    %v131 = vld [vmem:[%s3 + $0xc] sm:$0xf]
    %v132 = vld [vmem:[%s3 + $0x10] sm:$0xf]
    %v133 = vld [vmem:[%s3 + $0x14] sm:$0xf]
    %v134 = vld [vmem:[%s3 + $0x18] sm:$0xf]
    %v135 = vld [vmem:[%s3 + $0x1c] sm:$0xf]
    %v136 = vld [vmem:[%s3 + $0x20] sm:$0xf]
    %v137 = vld [vmem:[%s3 + $0x24] sm:$0xf]
    %v138 = vld [vmem:[%s3 + $0x28] sm:$0xf]
    %v139 = vld [vmem:[%s3 + $0x2c] sm:$0xf]
    %v140 = vld [vmem:[%s3 + $0x30] sm:$0xf]
    %v141 = vld [vmem:[%s3 + $0x34] sm:$0xf]
    %v142 = vld [vmem:[%s3 + $0x38] sm:$0xf]
    %v143 = vld [vmem:[%s3 + $0x3c] sm:$0xf]
    %v144 = vld [vmem:[#allocation7] sm:$0x1]
    %v146 = vperm.slane %v144, 0
    %v164 = vunpack.c.l.b16 %v128
    %v165 = vunpack.c.l.b16 %v129
    %v166 = vunpack.c.l.b16 %v130
    %v167 = vunpack.c.l.b16 %v131
    %v168 = vunpack.c.l.b16 %v132
    %v169 = vunpack.c.l.b16 %v133
    %v170 = vunpack.c.l.b16 %v134
    %v171 = vunpack.c.l.b16 %v135
    %v172 = vunpack.c.l.b16 %v136
    %v173 = vunpack.c.l.b16 %v137
    %v174 = vunpack.c.l.b16 %v138
    %v175 = vunpack.c.l.b16 %v139
    %v176 = vunpack.c.l.b16 %v140
    %v177 = vunpack.c.l.b16 %v141
    %v178 = vunpack.c.l.b16 %v142
    %v179 = vunpack.c.l.b16 %v143
    %v180 = vpack.c.b16 %v165, %v164
    %v181 = vpack.c.b16 %v167, %v166
    %v182 = vpack.c.b16 %v169, %v168
    %v183 = vpack.c.b16 %v171, %v170
    %v184 = vpack.c.b16 %v173, %v172
    %v185 = vpack.c.b16 %v175, %v174
    %v186 = vpack.c.b16 %v177, %v176
    %v187 = vpack.c.b16 %v179, %v178
    %196 = vmatpush.bf16.msra.mxu0 %v187
    %197 = vmatpush.bf16.msra.mxu0 %v186
    %198 = vmatpush.bf16.msra.mxu0 %v185
    %199 = vmatpush.bf16.msra.mxu0 %v184
    %200 = vmatpush.bf16.msra.mxu0 %v183
    %201 = vmatpush.bf16.msra.mxu0 %v182
    %202 = vmatpush.bf16.msra.mxu0 %v181
    %203 = vmatpush.bf16.msra.mxu0 %v180
    %204 = vmatmul.bf16.gmra.mxu0 %v127
    %v205 = vpop.f32.mrf.mxu0
    %v206 = vadd.f32 %v146, %v205
    %v207 = vpop.f32.mrf.mxu0
    %208 = vdwg.mxu0
    %vm209 = vcmp.gt.f32.partialorder %v206, 0.0
    %v210 = vmul.f32 %v206, 0.01
    %v211 = vsel %vm209, %v206, %v210
    %v212 = vpack.c.bf16 %v211, %v211
    %v213 = vld [vmem:[%s5] sm:$0xf]
    %v214 = vld [vmem:[%s5 + $0x4] sm:$0xf]
    %v215 = vld [vmem:[%s5 + $0x8] sm:$0xf]
    %v216 = vld [vmem:[%s5 + $0xc] sm:$0xf]
    %v217 = vld [vmem:[%s5 + $0x10] sm:$0xf]
    %v218 = vld [vmem:[%s5 + $0x14] sm:$0xf]
    %v219 = vld [vmem:[%s5 + $0x18] sm:$0xf]
    %v220 = vld [vmem:[%s5 + $0x1c] sm:$0xf]
    %v221 = vld [vmem:[%s5 + $0x20] sm:$0xf]
    %v222 = vld [vmem:[%s5 + $0x24] sm:$0xf]
    %v223 = vld [vmem:[%s5 + $0x28] sm:$0xf]
    %v224 = vld [vmem:[%s5 + $0x2c] sm:$0xf]
    %v225 = vld [vmem:[%s5 + $0x30] sm:$0xf]
    %v226 = vld [vmem:[%s5 + $0x34] sm:$0xf]
    %v227 = vld [vmem:[%s5 + $0x38] sm:$0xf]
    %v228 = vld [vmem:[%s5 + $0x3c] sm:$0xf]
    %v229 = vld [vmem:[#allocation8] sm:$0x1]
    %v231 = vperm.slane %v229, 0
    %v249 = vunpack.c.l.b16 %v213
    %v250 = vunpack.c.l.b16 %v214
    %v251 = vunpack.c.l.b16 %v215
    %v252 = vunpack.c.l.b16 %v216
    %v253 = vunpack.c.l.b16 %v217
    %v254 = vunpack.c.l.b16 %v218
    %v255 = vunpack.c.l.b16 %v219
    %v256 = vunpack.c.l.b16 %v220
    %v257 = vunpack.c.l.b16 %v221
    %v258 = vunpack.c.l.b16 %v222
    %v259 = vunpack.c.l.b16 %v223
    %v260 = vunpack.c.l.b16 %v224
    %v261 = vunpack.c.l.b16 %v225
    %v262 = vunpack.c.l.b16 %v226
    %v263 = vunpack.c.l.b16 %v227
    %v264 = vunpack.c.l.b16 %v228
    %v265 = vpack.c.b16 %v250, %v249
    %v266 = vpack.c.b16 %v252, %v251
    %v267 = vpack.c.b16 %v254, %v253
    %v268 = vpack.c.b16 %v256, %v255
    %v269 = vpack.c.b16 %v258, %v257
    %v270 = vpack.c.b16 %v260, %v259
    %v271 = vpack.c.b16 %v262, %v261
    %v272 = vpack.c.b16 %v264, %v263
    %281 = vmatpush.bf16.msra.mxu0 %v272
    %282 = vmatpush.bf16.msra.mxu0 %v271
    %283 = vmatpush.bf16.msra.mxu0 %v270
    %284 = vmatpush.bf16.msra.mxu0 %v269
    %285 = vmatpush.bf16.msra.mxu0 %v268
    %286 = vmatpush.bf16.msra.mxu0 %v267
    %287 = vmatpush.bf16.msra.mxu0 %v266
    %288 = vmatpush.bf16.msra.mxu0 %v265
    %289 = vmatmul.bf16.gmra.mxu0 %v212
    %v290 = vpop.f32.mrf.mxu0
    %v291 = vadd.f32 %v231, %v290
    %v292 = vpop.f32.mrf.mxu0
    %293 = vdwg.mxu0
    %vm294 = vcmask 64512
    %295 = vst.msk [vmem:[#allocation10] sm:$0xff] %vm294, %v291
    // Predicated region
    $region46: #{simple_mlp_forward.1} parent=1 // pred_check
      _
    $region47: #{simple_mlp_forward.1} parent=1 // pred_check_branch
      %297 = sbr.rel (0) target = $region49
    $region48: #{simple_mlp_forward.1} parent=1 // pred_region
      %299 = vsyncadd [#allocation4], 0
      %s301 = sshll.u32 [#allocation10], 4
      %s302 = int_to_ptr.vmem [resolvable:$true] %s301
      %s303 = sshll.u32 %s7, 4
      %s304 = int_to_ptr.hbm [resolvable:$true] %s303
      %306 = dma.vmem_to_hbm [thread:$0]  %s302, 128, %s304, [#allocation4]
    $region49: #{simple_mlp_forward.1} parent=1 // pred_fallthru
      _
    // Predicated region
    $region50: #{simple_mlp_forward.1} parent=1 // pred_check
      _
    $region51: #{simple_mlp_forward.1} parent=1 // pred_check_branch
      %308 = sbr.rel (0) target = $region53
    $region52: #{simple_mlp_forward.1} parent=1 // pred_region
      %310 = dma.done [#allocation4], 128
    $region53: #{simple_mlp_forward.1} parent=1 // pred_fallthru
      _
    %311 = vsyncpa [#allocation3], 1
    %312 = vsyncpa [#allocation6], 1
    %313 = vsyncpa [#allocation9], 1
    %314 = vsyncpa [#allocation4], 1

</llo_original>
